<compile_context>
chip_gen: v5e
topology: v5e:2x2
jax: 0.10.0
libtpu: 0.0.40
codegen_flags: <defaults>
</compile_context>

<pallas_src>
import jax
import jax.numpy as jnp
from jax.experimental import pallas as pl
from jax.experimental.pallas import tpu as pltpu


def _pick_tile(dim, align, cap):
    """Largest multiple of `align` that divides `dim` and is <= cap; else the full `dim`."""
    best = None
    t = align
    limit = min(dim, cap)
    while t <= limit:
        if dim % t == 0:
            best = t
        t += align
    return best if best is not None else dim


# ----------------------------------- kernels --------------------------------------------- #

def _perm_threshold_kernel(nm_ref, orders_ref, out_ref):
    # Permutation identity: rank(orders[b,p]) == orders[b,p], so
    # out[b, p] = orders[b, p] < num_masked[b].  Purely elementwise, HBM-bound.
    out_ref[...] = (orders_ref[...] < nm_ref[...]).astype(out_ref.dtype)


def _value_threshold_kernel(nm_ref, thr_ref, orders_ref, out_ref):
    # General tie-free ordering: out[b, p] = (orders[b,p] <= thr[b]) & (num_masked[b] > 0),
    # where thr[b] = nm[b]-th smallest order value (computed in the wrapper).
    keep = (orders_ref[...] <= thr_ref[...]) & (nm_ref[...] > 0)
    out_ref[...] = keep.astype(out_ref.dtype)


# ------------------------------ shared tiled launcher ------------------------------------ #

def _launch_rowwise_threshold(kernel, row_args, orders_arr, *, out_dtype):
    """row_args: list of (B,1) per-row scalars; orders_arr: (B,S) in its native dtype."""
    B, S = orders_arr.shape

    # Pad the seq dim to a multiple of 128 so every tile is lane-dense (unmasked vst).
    # Padded column values are irrelevant — those columns are sliced off below.
    S_pad = ((S + 127) // 128) * 128
    if S_pad != S:
        orders_arr = jnp.pad(orders_arr, ((0, 0), (0, S_pad - S)))

    # Large tiles to amortize the ~0.35us per-grid-step overhead (mem-bound kernel).
    tb = _pick_tile(B, 8, 256)
    ts = _pick_tile(S_pad, 128, 8192)

    # v7x megacore: keep >= 2 grid blocks when possible.  Split along seq only (keeps the
    # 128-multiple lane tile and the 1-byte-output legality); harmless on v5e/v6e (1 TC).
    if (B // tb) * (S_pad // ts) < 2 and S_pad >= 256:
        ts2 = _pick_tile(S_pad, 128, S_pad // 2)
        if S_pad // ts2 >= 2:
            ts = ts2

    # 1-byte output whenever the block tiling permits (full-dim batch blocks qualify).
    if jnp.dtype(out_dtype).itemsize == 1 and not (tb % 32 == 0 or tb == B):
        out_dtype = jnp.int32

    row_spec = pl.BlockSpec((tb, 1), lambda i, j: (i, 0))
    tile_spec = pl.BlockSpec((tb, ts), lambda i, j: (i, j))

    # Double-buffered footprint + headroom; explicit so large tiles fit on every gen
    # (v5e scoped default is only 16 MiB), clamped under v7x's 64 MiB physical VMEM.
    block_bytes = tb * ts * (orders_arr.dtype.itemsize + jnp.dtype(out_dtype).itemsize)
    vmem_limit = int(min(max(2 * block_bytes + (4 << 20), 32 << 20), 64 << 20))

    mask = pl.pallas_call(
        kernel,
        out_shape=jax.ShapeDtypeStruct((B, S_pad), out_dtype),
        grid=(B // tb, S_pad // ts),
        in_specs=[row_spec] * len(row_args) + [tile_spec],
        out_specs=tile_spec,
        compiler_params=pltpu.CompilerParams(
            dimension_semantics=("parallel", "parallel"),
            vmem_limit_bytes=vmem_limit),
    )(*row_args, orders_arr)

    return mask[:, :S] if S_pad != S else mask


# ----------------------------------- wrapper --------------------------------------------- #

def truncated_normal_mask(patches, orders, mask_rates, *, assume_permutation=True,
                          out_dtype=jnp.int8):
    """patches: (B, S, H) (shape only); orders: (B, S); mask_rates: (B,) float in [0, 1].

    Returns a (B, S) 0/1 mask (int8 by default; pass out_dtype=jnp.bool_ for bool).
    """
    B, S, _H = patches.shape

    # ceil(rate * S) hoisted out of the kernel, as int32 (no f32 math in-kernel).
    num_masked = jnp.ceil(mask_rates.astype(jnp.float32) * jnp.float32(S))
    num_masked = num_masked.astype(jnp.int32).reshape(B, 1)

    if assume_permutation:
        # Requires orders[b] to be a permutation of [0, S) (standard fractal-AR ordering).
        return _launch_rowwise_threshold(
            _perm_threshold_kernel, [num_masked], orders, out_dtype=out_dtype)

    # General path: arbitrary tie-free orderings.  Per-row sort + threshold gather in the
    # wrapper (O(S log S)) replaces the old O(S^2) pairwise-rank kernel entirely; the
    # kernel itself stays elementwise and HBM-bound.
    sorted_o = jnp.sort(orders, axis=-1)
    idx = jnp.clip(num_masked - 1, 0, S - 1)                      # (B, 1) int32
    thr = jnp.take_along_axis(sorted_o, idx, axis=-1)             # (B, 1), orders' dtype
    return _launch_rowwise_threshold(
        _value_threshold_kernel, [num_masked, thr], orders, out_dtype=out_dtype)


def sample_mask_rates(key, batch_size, std=0.25):
    # nn.init.trunc_normal_(mean=1.0, std=std, a=0.0, b=1.0) — same distribution via JAX's
    # truncated_normal (inverse-CDF).  Exact torch RNG stream is not reproducible.
    lower = (0.0 - 1.0) / std
    upper = (1.0 - 1.0) / std
    z = jax.random.truncated_normal(key, lower, upper, (batch_size,), dtype=jnp.float32)
    return 1.0 + std * z


if __name__ == "__main__":
    B, S, H = 2, 8, 32
    std = 0.25

    key = jax.random.PRNGKey(0)
    k_patches, k_orders, k_rates = jax.random.split(key, 3)

    patches = jax.random.normal(k_patches, (B, S, H), dtype=jnp.float32)
    # orders: a random permutation of [0, S) per batch row (typical fractal-AR ordering input)
    orders = jnp.stack(
        [jax.random.permutation(jax.random.fold_in(k_orders, b), S) for b in range(B)]
    ).astype(jnp.int32)
    mask_rates = sample_mask_rates(k_rates, B, std=std)

    mask_fast = truncated_normal_mask(patches, orders, mask_rates, assume_permutation=True)
    mask_gen = truncated_normal_mask(patches, orders, mask_rates, assume_permutation=False)
    jax.block_until_ready((mask_fast, mask_gen))

    # pure-JAX reference of the PyTorch forward (argsort + scatter), same mask_rates
    num_masked = jnp.ceil(mask_rates * S)
    positions = jnp.argsort(orders, axis=-1)
    src = jnp.arange(S)[None, :] < num_masked[:, None]
    ref = jnp.zeros((B, S), dtype=bool).at[jnp.arange(B)[:, None], positions].set(src)

    assert mask_fast.shape == (B, S)
    assert mask_gen.shape == (B, S)
    assert bool(jnp.all((mask_fast != 0) == ref))
    assert bool(jnp.all((mask_gen != 0) == ref))
    print("KERNEL_OK")
</pallas_src>

<mosaic_0001>
module attributes {stable_mosaic.version = 11 : i64} {
  func.func @_perm_threshold_kernel(%arg0: i32, %arg1: i32, %arg2: memref<2x1xi32, #tpu.memory_space<vmem>>, %arg3: memref<2x128xi32, #tpu.memory_space<vmem>>, %arg4: memref<2x128xi8, #tpu.memory_space<vmem>>) attributes {dimension_semantics = [#tpu.dimension_semantics<parallel>, #tpu.dimension_semantics<parallel>], iteration_bounds = array<i64: 1, 1>, scalar_prefetch = 0 : i64, scratch_operands = 0 : i64, tpu.core_type = #tpu.core_type<tc>, window_params = [{transform_indices = @transform_0, window_bounds = array<i64: 2, 1>}, {transform_indices = @transform_1, window_bounds = array<i64: 2, 128>}, {transform_indices = @transform_2, window_bounds = array<i64: 2, 128>}]} {
    %c0 = arith.constant 0 : index
    %c0_0 = arith.constant 0 : index
    %0 = vector.load %arg3[%c0, %c0_0] : memref<2x128xi32, #tpu.memory_space<vmem>>, vector<2x128xi32>
    %c0_1 = arith.constant 0 : index
    %c0_2 = arith.constant 0 : index
    %1 = vector.load %arg2[%c0_1, %c0_2] : memref<2x1xi32, #tpu.memory_space<vmem>>, vector<2x1xi32>
    %2 = vector.broadcast %1 : vector<2x1xi32> to vector<2x128xi32>
    %3 = arith.cmpi slt, %0, %2 : vector<2x128xi32>
    %4 = arith.extui %3 : vector<2x128xi1> to vector<2x128xi8>
    %c0_3 = arith.constant 0 : index
    %c0_4 = arith.constant 0 : index
    %5 = vector.load %arg4[%c0_3, %c0_4] : memref<2x128xi8, #tpu.memory_space<vmem>>, vector<2x128xi8>
    tpu.vector_store %arg4[%c0_3, %c0_4], %4 {strides = array<i32>} : memref<2x128xi8, #tpu.memory_space<vmem>>, vector<2x128xi8>,
    return
  }
  func.func @transform_0(%arg0: i32, %arg1: i32) -> (i32, i32) {
    %c0_i32 = arith.constant 0 : i32
    %c0_i32_0 = arith.constant 0 : i32
    return %arg0, %c0_i32 : i32, i32
  }
  func.func @transform_1(%arg0: i32, %arg1: i32) -> (i32, i32) {
    %c0_i32 = arith.constant 0 : i32
    return %arg0, %arg1 : i32, i32
  }
  func.func @transform_2(%arg0: i32, %arg1: i32) -> (i32, i32) {
    %c0_i32 = arith.constant 0 : i32
    return %arg0, %arg1 : i32, i32
  }
}

</mosaic_0001>

<llo_original>
// kernel: tpu_custom_call.1
$region0: #{tpu_custom_call.1}
  #allocation0 [shape = 'u32[]', space=smem, size = 0x4, offset = 0x4, fixed_abs, tag = 'smem constant byte address 0x4 - core index']
  #allocation1 [shape = 'u32[72,128]{1,0:T(1,128)}', space=vmem, size = 0x9000, scoped, tag = 'internal scratch']
  %s0 = inlined_call_operand.vmem [shape: s32[2,1], index: 0, kind: input, shape index: {}]
  %s1 = inlined_call_operand.vmem [shape: s32[2,128], index: 1, kind: input, shape index: {}]
  %s2 = inlined_call_operand.hbm [shape: s8[2,128], index: 2, kind: output, shape index: {}]
  %s3 = sld [smem:[#allocation0]]
  $region18: #{tpu_custom_call.1} parent=0
    _
  %s5 = ssub.s32 1, %s3
  %s6 = scalar_select 0, %s5, %s3
  $region1: #{tpu_custom_call.1} parent=0
    #allocation2 [shape = 'u8[512]{0}', space=vmem, size = 0x400, scoped, tag = 'output window, operand 0, single buffered']
    #allocation3 [shape = 's32[1]{0}', space=sflag, size = 0x4, scoped, tag = 'scoped memory for tpu_custom_call.1']
    %7 = vsyncpa [#allocation3], 0
    // Predicated region
    $region2: #{tpu_custom_call.1} parent=1 // pred_check
      _
    $region3: #{tpu_custom_call.1} parent=1 // pred_check_branch
      %9 = sbr.rel (0) target = $region5
    $region4: #{tpu_custom_call.1} parent=1 // pred_region
      _
    $region5: #{tpu_custom_call.1} parent=1 // pred_fallthru
      _
    // Predicated region
    $region6: #{tpu_custom_call.1} parent=1 // pred_check
      _
    $region7: #{tpu_custom_call.1} parent=1 // pred_check_branch
      %11 = sbr.rel (0) target = $region9
    $region8: #{tpu_custom_call.1} parent=1 // pred_region
      _
    $region9: #{tpu_custom_call.1} parent=1 // pred_fallthru
      _
    %v14 = vld [vmem:[%s1] sm:$0x3]
    %v15 = vld [vmem:[%s0] sm:$0x3]
    %16 = vset.pattern.permute.xlu0 0
    %17 = vperm.xlu0 %16, %v15
    %v18 = vpop.permute.xlu0 %17
    %vm19 = vcmp.lt.s32.totalorder %v14, %v18
    %vm20 = vmpackc.low %vm19, %vm19
    %v21 = vsel %vm20, 16711935, 0
    %v22 = vsel %vm20, 16711935, 0
    %v23 = vpack.c.b8 %v22, %v21
    %vm24 = vnez %v23
    %v25 = vsel %vm24, 16843009, 0
    %vm26 = vcmask 1040384
    %vm27 = vsmask.f32 256
    %vm28 = vmand %vm26, %vm27
    %v29 = vld [vmem:[#allocation2] sm:$0x1]
    %v30 = vsel %vm28, %v25, %v29
    %31 = vst [vmem:[#allocation2] sm:$0x1] %v30
    // Predicated region
    $region10: #{tpu_custom_call.1} parent=1 // pred_check
      _
    $region11: #{tpu_custom_call.1} parent=1 // pred_check_branch
      %33 = sbr.rel (0) target = $region13
    $region12: #{tpu_custom_call.1} parent=1 // pred_region
      %35 = vsyncadd [#allocation3], 0
      %s37 = sshll.u32 [#allocation2], 4
      %s38 = int_to_ptr.vmem [resolvable:$true] %s37
      %s39 = sshll.u32 %s2, 4
      %s40 = int_to_ptr.hbm [resolvable:$true] %s39
      %42 = dma.vmem_to_hbm [thread:$0]  %s38, 16, %s40, [#allocation3]
    $region13: #{tpu_custom_call.1} parent=1 // pred_fallthru
      _
    // Predicated region
    $region14: #{tpu_custom_call.1} parent=1 // pred_check
      _
    $region15: #{tpu_custom_call.1} parent=1 // pred_check_branch
      %44 = sbr.rel (0) target = $region17
    $region16: #{tpu_custom_call.1} parent=1 // pred_region
      %46 = dma.done [#allocation3], 16
    $region17: #{tpu_custom_call.1} parent=1 // pred_fallthru
      _
    %47 = vsyncpa [#allocation3], 1

</llo_original>
